<compile_context>
chip_gen: v5e
topology: v5e:2x2
jax: 0.10.0
libtpu: 0.0.40
codegen_flags: <defaults>
</compile_context>

<pallas_src>
import functools

import jax
import jax.numpy as jnp
from jax.experimental import pallas as pl
from jax.experimental.pallas import tpu as pltpu

IN_FEATURES = 158
OUT_FEATURES = 79


def _round_up(n, m):
    return ((n + m - 1) // m) * m


def _fused_kernel(x_ref, w_ref, b_ref, o_ref):
    """Small-batch fast path: whole batch in one block; linear + dim=0 softmax."""
    y = jnp.dot(x_ref[...].astype(jnp.bfloat16), w_ref[...],
                preferred_element_type=jnp.float32) + b_ref[...]
    m = jnp.max(y, axis=0, keepdims=True)
    e = jnp.exp(y - m)
    l = jnp.sum(e, axis=0, keepdims=True)
    o_ref[...] = e * (1.0 / l)          # exact divide on (1, 79) — cheap & accurate


def _stats_kernel(x_ref, w_ref, b_ref, m_ref, l_ref, *, batch, tile_b):
    """Pass 1: per-column (dim=0) running max / sum-exp of x @ W^T + b."""
    i = pl.program_id(0)

    @pl.when(i == 0)
    def _():
        m_ref[...] = jnp.full_like(m_ref, -jnp.inf)
        l_ref[...] = jnp.zeros_like(l_ref)

    y = jnp.dot(x_ref[...].astype(jnp.bfloat16), w_ref[...],
                preferred_element_type=jnp.float32) + b_ref[...]

    # Ragged last block: out-of-bounds rows hold unspecified data; mask them
    # out of the dim=0 statistics.
    if batch % tile_b != 0:
        row = i * tile_b + jax.lax.broadcasted_iota(jnp.int32, y.shape, 0)
        y = jnp.where(row < batch, y, -jnp.inf)

    m_old = m_ref[...]
    m_new = jnp.maximum(m_old, jnp.max(y, axis=0, keepdims=True))
    alpha = jnp.exp(m_old - m_new)
    l_ref[...] = alpha * l_ref[...] + jnp.sum(jnp.exp(y - m_new), axis=0, keepdims=True)
    m_ref[...] = m_new


def _normalize_kernel(x_ref, w_ref, b_ref, m_ref, l_ref, o_ref):
    """Pass 2: recompute the logits and normalize with the global stats."""
    y = jnp.dot(x_ref[...].astype(jnp.bfloat16), w_ref[...],
                preferred_element_type=jnp.float32) + b_ref[...]
    o_ref[...] = jnp.exp(y - m_ref[...]) * (1.0 / l_ref[...])
    # Out-of-bounds rows of a ragged last block are clipped on write-back.


@functools.partial(jax.jit, static_argnames=("tile_b",))
def dense_model_forward(x, w, b, *, tile_b=2048):
    """x: [B, 158] f32, w: [79, 158] f32 (PyTorch layout), b: [79] f32 -> [B, 79] f32."""
    B = x.shape[0]

    # Tiny one-time weight transforms (25 KiB) — the only wrapper-side data touch.
    w_t = w.T.astype(jnp.bfloat16)                       # (158, 79) bf16
    b_r = b.astype(jnp.float32).reshape(1, OUT_FEATURES)  # (1, 79) f32

    vmem_limit = 32 * 1024 * 1024
    cparams_arb = pltpu.CompilerParams(
        dimension_semantics=("arbitrary",), vmem_limit_bytes=vmem_limit)
    cparams_par = pltpu.CompilerParams(
        dimension_semantics=("parallel",), vmem_limit_bytes=vmem_limit)

    if B <= tile_b:
        # Fused single-call fast path: one x read, one output write.
        return pl.pallas_call(
            _fused_kernel,
            out_shape=jax.ShapeDtypeStruct((B, OUT_FEATURES), jnp.float32),
            grid=(1,),
            in_specs=[
                pl.BlockSpec((B, IN_FEATURES), lambda i: (0, 0)),
                pl.BlockSpec((IN_FEATURES, OUT_FEATURES), lambda i: (0, 0)),
                pl.BlockSpec((1, OUT_FEATURES), lambda i: (0, 0)),
            ],
            out_specs=pl.BlockSpec((B, OUT_FEATURES), lambda i: (0, 0)),
            compiler_params=cparams_arb,
        )(x, w_t, b_r)

    # General path: two passes over x, no logits round-trip.
    TB = max(16, (tile_b // 16) * 16)       # multiple of 16 for bf16 packing
    num_tiles = pl.cdiv(B, TB)

    m_stat, l_stat = pl.pallas_call(
        functools.partial(_stats_kernel, batch=B, tile_b=TB),
        out_shape=(
            jax.ShapeDtypeStruct((1, OUT_FEATURES), jnp.float32),
            jax.ShapeDtypeStruct((1, OUT_FEATURES), jnp.float32),
        ),
        grid=(num_tiles,),
        in_specs=[
            pl.BlockSpec((TB, IN_FEATURES), lambda i: (i, 0)),
            pl.BlockSpec((IN_FEATURES, OUT_FEATURES), lambda i: (0, 0)),
            pl.BlockSpec((1, OUT_FEATURES), lambda i: (0, 0)),
        ],
        out_specs=(
            pl.BlockSpec((1, OUT_FEATURES), lambda i: (0, 0)),
            pl.BlockSpec((1, OUT_FEATURES), lambda i: (0, 0)),
        ),
        compiler_params=cparams_arb,
    )(x, w_t, b_r)

    return pl.pallas_call(
        _normalize_kernel,
        out_shape=jax.ShapeDtypeStruct((B, OUT_FEATURES), jnp.float32),
        grid=(num_tiles,),
        in_specs=[
            pl.BlockSpec((TB, IN_FEATURES), lambda i: (i, 0)),
            pl.BlockSpec((IN_FEATURES, OUT_FEATURES), lambda i: (0, 0)),
            pl.BlockSpec((1, OUT_FEATURES), lambda i: (0, 0)),
            pl.BlockSpec((1, OUT_FEATURES), lambda i: (0, 0)),
            pl.BlockSpec((1, OUT_FEATURES), lambda i: (0, 0)),
        ],
        out_specs=pl.BlockSpec((TB, OUT_FEATURES), lambda i: (i, 0)),
        compiler_params=cparams_par,
    )(x, w_t, b_r, m_stat, l_stat)


if __name__ == "__main__":
    key = jax.random.PRNGKey(0)
    k_x1, k_x2, k_w, k_b = jax.random.split(key, 4)

    # nn.Linear-style uniform(-1/sqrt(fan_in), 1/sqrt(fan_in)) init.
    bound = 1.0 / (IN_FEATURES ** 0.5)
    w = jax.random.uniform(k_w, (OUT_FEATURES, IN_FEATURES),
                           minval=-bound, maxval=bound, dtype=jnp.float32)
    b = jax.random.uniform(k_b, (OUT_FEATURES,),
                           minval=-bound, maxval=bound, dtype=jnp.float32)

    def ref_bf16(xv):
        xb = xv.astype(jnp.bfloat16).astype(jnp.float32)
        wb = w.astype(jnp.bfloat16).astype(jnp.float32)
        return jax.nn.softmax(xb @ wb.T + b, axis=0)

    # --- Small batch: fused single-call fast path -------------------------
    B1 = 8
    x1 = jax.random.normal(k_x1, (B1, IN_FEATURES), dtype=jnp.float32)
    out1 = jax.block_until_ready(dense_model_forward(x1, w, b))
    assert out1.shape == (B1, OUT_FEATURES)
    assert jnp.allclose(out1, ref_bf16(x1), atol=2e-3, rtol=2e-3)
    assert jnp.allclose(out1, jax.nn.softmax(x1 @ w.T + b, axis=0),
                        atol=2e-2, rtol=2e-2)
    assert jnp.allclose(jnp.sum(out1, axis=0), 1.0, atol=1e-4)

    # --- Multi-tile path with ragged last block ---------------------------
    B2 = 40
    x2 = jax.random.normal(k_x2, (B2, IN_FEATURES), dtype=jnp.float32)
    out2 = jax.block_until_ready(dense_model_forward(x2, w, b, tile_b=16))
    assert out2.shape == (B2, OUT_FEATURES)
    assert jnp.allclose(out2, ref_bf16(x2), atol=2e-3, rtol=2e-3)
    assert jnp.allclose(out2, jax.nn.softmax(x2 @ w.T + b, axis=0),
                        atol=2e-2, rtol=2e-2)
    assert jnp.allclose(jnp.sum(out2, axis=0), 1.0, atol=1e-4)

    print("KERNEL_OK")
</pallas_src>

<mosaic_0001>
module attributes {stable_mosaic.version = 11 : i64} {
  func.func @_fused_kernel(%arg0: i32, %arg1: memref<8x158xf32, #tpu.memory_space<vmem>>, %arg2: memref<158x79xbf16, #tpu.memory_space<vmem>>, %arg3: memref<1x79xf32, #tpu.memory_space<vmem>>, %arg4: memref<8x79xf32, #tpu.memory_space<vmem>>) attributes {dimension_semantics = [#tpu.dimension_semantics<arbitrary>], iteration_bounds = array<i64: 1>, scalar_prefetch = 0 : i64, scratch_operands = 0 : i64, tpu.core_type = #tpu.core_type<tc>, window_params = [{pipeline_mode = #tpu.pipeline_mode<synchronous>, transform_indices = @transform_0, window_bounds = array<i64: 8, 158>}, {pipeline_mode = #tpu.pipeline_mode<synchronous>, transform_indices = @transform_1, window_bounds = array<i64: 158, 79>}, {pipeline_mode = #tpu.pipeline_mode<synchronous>, transform_indices = @transform_2, window_bounds = array<i64: 1, 79>}, {pipeline_mode = #tpu.pipeline_mode<synchronous>, transform_indices = @transform_3, window_bounds = array<i64: 8, 79>}]} {
    %c0 = arith.constant 0 : index
    %c0_0 = arith.constant 0 : index
    %0 = vector.load %arg1[%c0, %c0_0] : memref<8x158xf32, #tpu.memory_space<vmem>>, vector<8x158xf32>
    %1 = arith.truncf %0 : vector<8x158xf32> to vector<8x158xbf16>
    %c0_1 = arith.constant 0 : index
    %c0_2 = arith.constant 0 : index
    %2 = vector.load %arg2[%c0_1, %c0_2] : memref<158x79xbf16, #tpu.memory_space<vmem>>, vector<158x79xbf16>
    %cst = arith.constant dense<0.000000e+00> : vector<8x79xf32>
    %3 = tpu.matmul %1, %2, %cst {dimension_numbers = #tpu.dot_dimension_numbers<[1], [0], [0], [1], [0, 0, 1, 1], [], []>} : vector<8x158xbf16>, vector<158x79xbf16>, vector<8x79xf32> -> vector<8x79xf32>
    %c0_3 = arith.constant 0 : index
    %c0_4 = arith.constant 0 : index
    %4 = vector.load %arg3[%c0_3, %c0_4] : memref<1x79xf32, #tpu.memory_space<vmem>>, vector<1x79xf32>
    %5 = vector.broadcast %4 : vector<1x79xf32> to vector<8x79xf32>
    %6 = arith.addf %3, %5 : vector<8x79xf32>
    %cst_5 = arith.constant dense<0xFF800000> : vector<79xf32>
    %7 = vector.multi_reduction <maximumf>, %6, %cst_5 [0] : vector<8x79xf32> to vector<79xf32>
    %8 = vector.shape_cast %7 : vector<79xf32> to vector<1x79xf32>
    %9 = vector.broadcast %8 : vector<1x79xf32> to vector<8x79xf32>
    %10 = arith.subf %6, %9 : vector<8x79xf32>
    %11 = math.exp %10 : vector<8x79xf32>
    %cst_6 = arith.constant dense<0.000000e+00> : vector<79xf32>
    %12 = vector.multi_reduction <add>, %11, %cst_6 [0] : vector<8x79xf32> to vector<79xf32>
    %13 = vector.shape_cast %12 : vector<79xf32> to vector<1x79xf32>
    %cst_7 = arith.constant 1.000000e+00 : f32
    %14 = vector.broadcast %cst_7 : f32 to vector<1x79xf32>
    %15 = arith.divf %14, %13 : vector<1x79xf32>
    %16 = vector.broadcast %15 : vector<1x79xf32> to vector<8x79xf32>
    %17 = arith.mulf %11, %16 : vector<8x79xf32>
    %c0_8 = arith.constant 0 : index
    %c0_9 = arith.constant 0 : index
    %18 = vector.load %arg4[%c0_8, %c0_9] : memref<8x79xf32, #tpu.memory_space<vmem>>, vector<8x79xf32>
    tpu.vector_store %arg4[%c0_8, %c0_9], %17 {strides = array<i32>} : memref<8x79xf32, #tpu.memory_space<vmem>>, vector<8x79xf32>,
    return
  }
  func.func @transform_0(%arg0: i32) -> (i32, i32) {
    %c0_i32 = arith.constant 0 : i32
    %c0_i32_0 = arith.constant 0 : i32
    %c0_i32_1 = arith.constant 0 : i32
    return %c0_i32, %c0_i32_0 : i32, i32
  }
  func.func @transform_1(%arg0: i32) -> (i32, i32) {
    %c0_i32 = arith.constant 0 : i32
    %c0_i32_0 = arith.constant 0 : i32
    %c0_i32_1 = arith.constant 0 : i32
    return %c0_i32, %c0_i32_0 : i32, i32
  }
  func.func @transform_2(%arg0: i32) -> (i32, i32) {
    %c0_i32 = arith.constant 0 : i32
    %c0_i32_0 = arith.constant 0 : i32
    %c0_i32_1 = arith.constant 0 : i32
    return %c0_i32, %c0_i32_0 : i32, i32
  }
  func.func @transform_3(%arg0: i32) -> (i32, i32) {
    %c0_i32 = arith.constant 0 : i32
    %c0_i32_0 = arith.constant 0 : i32
    %c0_i32_1 = arith.constant 0 : i32
    return %c0_i32, %c0_i32_0 : i32, i32
  }
}

</mosaic_0001>

<llo_original>
// kernel: dense_model_forward.1
$region0: #{dense_model_forward.1}
  #allocation0 [shape = 'u32[]', space=smem, size = 0x4, offset = 0x4, fixed_abs, tag = 'smem constant byte address 0x4 - core index']
  #allocation1 [shape = 'u32[72,128]{1,0:T(1,128)}', space=vmem, size = 0x9000, scoped, tag = 'internal scratch']
  %s0 = inlined_call_operand.vmem [shape: f32[8,158], index: 0, kind: input, shape index: {}]
  %s1 = inlined_call_operand.vmem [shape: bf16[158,79], index: 1, kind: input, shape index: {}]
  %s2 = inlined_call_operand.vmem [shape: f32[1,79], index: 2, kind: input, shape index: {}]
  %s3 = inlined_call_operand.hbm [shape: f32[8,79], index: 3, kind: output, shape index: {}]
  %s4 = sld [smem:[#allocation0]]
  $region22: #{dense_model_forward.1} parent=0
    _
  %s6 = ssub.s32 1, %s4
  %s7 = scalar_select 0, %s6, %s4
  $region1: #{dense_model_forward.1} parent=0
    #allocation2 [shape = 'u8[4096]{0}', space=vmem, size = 0x1000, scoped, tag = 'output window, operand 0, single buffered']
    #allocation3 [shape = 's32[1]{0}', space=sflag, size = 0x4, scoped, tag = 'scoped memory for dense_model_forward.1']
    %8 = vsyncpa [#allocation3], 0
    // Predicated region
    $region2: #{dense_model_forward.1} parent=1 // pred_check
      _
    $region3: #{dense_model_forward.1} parent=1 // pred_check_branch
      %10 = sbr.rel (0) target = $region5
    $region4: #{dense_model_forward.1} parent=1 // pred_region
      _
    $region5: #{dense_model_forward.1} parent=1 // pred_fallthru
      _
    // Predicated region
    $region6: #{dense_model_forward.1} parent=1 // pred_check
      _
    $region7: #{dense_model_forward.1} parent=1 // pred_check_branch
      %12 = sbr.rel (0) target = $region9
    $region8: #{dense_model_forward.1} parent=1 // pred_region
      _
    $region9: #{dense_model_forward.1} parent=1 // pred_fallthru
      _
    // Predicated region
    $region10: #{dense_model_forward.1} parent=1 // pred_check
      _
    $region11: #{dense_model_forward.1} parent=1 // pred_check_branch
      %14 = sbr.rel (0) target = $region13
    $region12: #{dense_model_forward.1} parent=1 // pred_region
      _
    $region13: #{dense_model_forward.1} parent=1 // pred_fallthru
      _
    %v16 = vld [vmem:[%s0] sm:$0xff]
    %v17 = vld [vmem:[%s0 + $0x8] sm:$0xff]
    %v18 = vpack.c.bf16 %v16, %v16
    %v19 = vpack.c.bf16 %v17, %v17
    %v20 = vld [vmem:[%s1] sm:$0xf]
    %v21 = vld [vmem:[%s1 + $0x4] sm:$0xf]
    %v22 = vld [vmem:[%s1 + $0x8] sm:$0xf]
    %v23 = vld [vmem:[%s1 + $0xc] sm:$0xf]
    %v24 = vld [vmem:[%s1 + $0x10] sm:$0xf]
    %v25 = vld [vmem:[%s1 + $0x14] sm:$0xf]
    %v26 = vld [vmem:[%s1 + $0x18] sm:$0xf]
    %v27 = vld [vmem:[%s1 + $0x1c] sm:$0xf]
    %v28 = vld [vmem:[%s1 + $0x20] sm:$0xf]
    %v29 = vld [vmem:[%s1 + $0x24] sm:$0xf]
    %v30 = vld [vmem:[%s1 + $0x28] sm:$0xf]
    %v31 = vld [vmem:[%s1 + $0x2c] sm:$0xf]
    %v32 = vld [vmem:[%s1 + $0x30] sm:$0xf]
    %v33 = vld [vmem:[%s1 + $0x34] sm:$0xf]
    %v34 = vld [vmem:[%s1 + $0x38] sm:$0xf]
    %v35 = vld [vmem:[%s1 + $0x3c] sm:$0xf]
    %v36 = vld [vmem:[%s1 + $0x40] sm:$0xf]
    %v37 = vld [vmem:[%s1 + $0x44] sm:$0xf]
    %v38 = vld [vmem:[%s1 + $0x48] sm:$0xf]
    %v39 = vld [vmem:[%s1 + $0x4c] sm:$0x7]
    %v40 = vld [vmem:[%s2] sm:$0x1]
    %v42 = vperm.slane %v40, 0
    %v64 = vunpack.c.l.b16 %v20
    %v65 = vunpack.c.l.b16 %v21
    %v66 = vunpack.c.l.b16 %v22
    %v67 = vunpack.c.l.b16 %v23
    %v68 = vunpack.c.l.b16 %v24
    %v69 = vunpack.c.l.b16 %v25
    %v70 = vunpack.c.l.b16 %v26
    %v71 = vunpack.c.l.b16 %v27
    %v72 = vunpack.c.l.b16 %v28
    %v73 = vunpack.c.l.b16 %v29
    %v74 = vunpack.c.l.b16 %v30
    %v75 = vunpack.c.l.b16 %v31
    %v76 = vunpack.c.l.b16 %v32
    %v77 = vunpack.c.l.b16 %v33
    %v78 = vunpack.c.l.b16 %v34
    %v79 = vunpack.c.l.b16 %v35
    %v80 = vunpack.c.l.b16 %v36
    %v81 = vunpack.c.l.b16 %v37
    %v82 = vunpack.c.l.b16 %v38
    %v83 = vunpack.c.l.b16 %v39
    %v84 = vpack.c.b16 %v65, %v64
    %v85 = vpack.c.b16 %v67, %v66
    %v86 = vpack.c.b16 %v69, %v68
    %v87 = vpack.c.b16 %v71, %v70
    %v88 = vpack.c.b16 %v73, %v72
    %v89 = vpack.c.b16 %v75, %v74
    %v90 = vpack.c.b16 %v77, %v76
    %v91 = vpack.c.b16 %v79, %v78
    %v92 = vpack.c.b16 %v81, %v80
    %v93 = vpack.c.b16 %v83, %v82
    %vm103 = vcmask 244736
    %v105 = vsel %vm103, %v19, 0
    %vm107 = vcmask 1046528
    %v109 = vsel %vm107, %v93, 0
    %111 = vmatpush.bf16.msra.mxu0 %v91
    %112 = vmatpush.bf16.msra.mxu0 %v90
    %113 = vmatpush.bf16.msra.mxu0 %v89
    %114 = vmatpush.bf16.msra.mxu0 %v88
    %115 = vmatpush.bf16.msra.mxu0 %v87
    %116 = vmatpush.bf16.msra.mxu0 %v86
    %117 = vmatpush.bf16.msra.mxu0 %v85
    %118 = vmatpush.bf16.msra.mxu0 %v84
    %119 = vmatmul.bf16.gmra.mxu0 %v18
    %v120 = vpop.f32.mrf.mxu0
    %v121 = vadd.f32 %v42, %v120
    %v122 = vpop.f32.mrf.mxu0
    %123 = vdwg.mxu0
    %124 = vmatpush.bf16.msra.mxu0 0
    %125 = vmatpush.bf16.msra.mxu0 0
    %126 = vmatpush.bf16.msra.mxu0 0
    %127 = vmatpush.bf16.msra.mxu0 0
    %128 = vmatpush.bf16.msra.mxu0 0
    %129 = vmatpush.bf16.msra.mxu0 0
    %130 = vmatpush.bf16.msra.mxu0 %v109
    %131 = vmatpush.bf16.msra.mxu0 %v92
    %132 = vmatmul.bf16.gmra.mxu0 %v105
    %v133 = vpop.f32.mrf.mxu0
    %v134 = vadd.f32 %v121, %v133
    %v135 = vpop.f32.mrf.mxu0
    %136 = vdwg.mxu0
    %vm137 = vcmask 646144
    %v138 = vsel %vm137, %v134, -inf
    %v139 = vrot.slane %v138, 4
    %v140 = vmax.f32 %v138, %v139
    %v141 = vrot.slane %v140, 2
    %v142 = vmax.f32 %v140, %v141
    %v143 = vrot.slane %v142, 1
    %v144 = vmax.f32 %v142, %v143
    %v145 = vsub.f32 %v134, %v144
    %v146 = vmul.f32 %v145, 1.442695
    %v147 = vpow.pop %v146
    %v148 = vsel %vm137, %v147, 0.0
    %v149 = vrot.slane %v148, 4
    %v150 = vadd.f32 %v148, %v149
    %v151 = vrot.slane %v150, 2
    %v152 = vadd.f32 %v150, %v151
    %v153 = vrot.slane %v152, 1
    %v154 = vadd.f32 %v152, %v153
    %v155 = vrcp.pop %v154
    %v156 = vmul.f32 %v154, %v155
    %v157 = vsub.f32 1.0, %v156
    %v158 = vmul.f32 %v155, %v157
    %v159 = vadd.f32 %v155, %v158
    %vm160 = vweird.f32 %v154
    %vm161 = vweird.f32 %v155
    %vm162 = vmor %vm160, %vm161
    %v163 = vsel %vm162, %v155, %v159
    %v164 = vand.u32 2147483647, %v154
    %vm165 = vcmp.eq.f32.partialorder %v164, 8.507059e+37
    %v166 = vand.u32 %v154, 2147483648
    %v167 = vor.u32 1.1754944e-38, %v166
    %v168 = vsel %vm165, %v167, %v163
    %v169 = vmul.f32 1.0, %v168
    %v170 = vmul.f32 %v147, %v169
    %171 = vst.msk [vmem:[#allocation2] sm:$0xff] %vm137, %v170
    // Predicated region
    $region14: #{dense_model_forward.1} parent=1 // pred_check
      _
    $region15: #{dense_model_forward.1} parent=1 // pred_check_branch
      %173 = sbr.rel (0) target = $region17
    $region16: #{dense_model_forward.1} parent=1 // pred_region
      %175 = vsyncadd [#allocation3], 0
      %s177 = sshll.u32 [#allocation2], 4
      %s178 = int_to_ptr.vmem [resolvable:$true] %s177
      %s179 = sshll.u32 %s3, 4
      %s180 = int_to_ptr.hbm [resolvable:$true] %s179
      %182 = dma.vmem_to_hbm [thread:$0]  %s178, 128, %s180, [#allocation3]
    $region17: #{dense_model_forward.1} parent=1 // pred_fallthru
      _
    // Predicated region
    $region18: #{dense_model_forward.1} parent=1 // pred_check
      _
    $region19: #{dense_model_forward.1} parent=1 // pred_check_branch
      %184 = sbr.rel (0) target = $region21
    $region20: #{dense_model_forward.1} parent=1 // pred_region
      %186 = dma.done [#allocation3], 128
    $region21: #{dense_model_forward.1} parent=1 // pred_fallthru
      _
    %187 = vsyncpa [#allocation3], 1

</llo_original>
